<compile_context>
chip_gen: v6e
topology: v6e:2x2x1
jax: 0.10.0
libtpu: 0.0.40
codegen_flags: <defaults>
</compile_context>

<pallas_src>
import functools

import jax
import jax.numpy as jnp
from jax import lax
from jax.experimental import pallas as pl
from jax.experimental.pallas import tpu as pltpu


def _baf_kernel(x_ref, lt_ref, las_ref,
                w_it_ref, b_it_ref,
                w_ia_ref, b_ia_ref,
                w_pool_ref,
                out_ref, *, seq_len):
    rows, _ = x_ref.shape                 # rows = bt * seq_len
    bt = rows // seq_len

    x = x_ref[...]                        # (rows, H) bf16

    # Input-side transforms: bf16 MXU matmuls, f32 accumulation, f32 sigmoid.
    it = jax.nn.sigmoid(
        jnp.dot(x, w_it_ref[...], preferred_element_type=jnp.float32)
        + b_it_ref[...])                  # (rows, D) f32
    ia = jax.nn.sigmoid(
        jnp.dot(x, w_ia_ref[...], preferred_element_type=jnp.float32)
        + b_ia_ref[...])                  # (rows, D) f32

    # scores[r, l] = sum_d ctx[d] * ia[r, d] * la[l, d]
    #   ctx is folded into la_scaled; contract on D directly (no transpose).
    scores = lax.dot_general(
        ia.astype(las_ref.dtype), las_ref[...],
        dimension_numbers=(((1,), (1,)), ((), ())),
        preferred_element_type=jnp.float32)            # (rows, L) f32

    # Numerically stable softmax over labels; reciprocal on the EUP.
    m = jnp.max(scores, axis=-1, keepdims=True)
    e = jnp.exp(scores - m)
    attn = e * pl.reciprocal(jnp.sum(e, axis=-1, keepdims=True), approx=True)

    # al[r, d] = sum_l attn[r, l] * lt[l, d]
    al = jnp.dot(attn.astype(lt_ref.dtype), lt_ref[...],
                 preferred_element_type=jnp.float32)   # (rows, D) f32

    # fusion[b, d] = sum_s it[b*S + s, d] * al[b*S + s, d]
    fusion = jnp.sum((it * al).reshape(bt, seq_len, -1), axis=1)   # (bt, D)

    # pool: Linear(D -> H, bias=False)
    out = jnp.dot(fusion.astype(w_pool_ref.dtype), w_pool_ref[...],
                  preferred_element_type=jnp.float32)              # (bt, H)
    out_ref[...] = out.astype(out_ref.dtype)


def bilinear_attention_fusion(x, labels, params, *, target_rows=256):
    """x: (B, S, H) f32; labels: (L, H) f32; params: dict. -> (B, H) f32.

    target_rows: rows of the flattened (B*S, H) LHS per grid step.
      256 feeds the 256x256 MXU on v6e/v7x; use 128 on v5e.
    """
    B, S, H = x.shape
    L, _ = labels.shape
    D = params["w_it"].shape[1]

    # ---- grid-invariant label-side work, hoisted out of the grid ----
    lt = jax.nn.sigmoid(labels @ params["w_lt"] + params["b_lt"])    # (L, D)
    la = jax.nn.sigmoid(labels @ params["w_la"] + params["b_la"])    # (L, D)
    la_scaled = la * params["ctx"]                                   # fold ctx

    # ---- row tiling: bt batch elements (= bt*S rows) per grid step ----
    bt = max(1, min(B, target_rows // max(S, 1)))
    # keep the row block sublane-friendly when possible (bf16 packs 16 rows).
    while bt > 1 and (bt * S) % 16 != 0:
        bt -= 1
    b_pad = pl.cdiv(B, bt) * bt
    if b_pad != B:
        # Padded batch rows are computed and then discarded (no NaNs possible).
        x = jnp.concatenate([x, jnp.zeros((b_pad - B, S, H), x.dtype)], axis=0)
    grid = (b_pad // bt,)

    bf16 = jnp.bfloat16
    x_flat = x.reshape(b_pad * S, H).astype(bf16)

    inputs = (
        x_flat,
        lt.astype(bf16), la_scaled.astype(bf16),
        params["w_it"].astype(bf16), params["b_it"],
        params["w_ia"].astype(bf16), params["b_ia"],
        params["w_pool"].astype(bf16),
    )

    full = lambda a: pl.BlockSpec(a.shape, lambda b: (0,) * a.ndim)
    kernel = functools.partial(_baf_kernel, seq_len=S)

    out = pl.pallas_call(
        kernel,
        out_shape=jax.ShapeDtypeStruct((b_pad, H), jnp.float32),
        grid_spec=pltpu.PrefetchScalarGridSpec(
            num_scalar_prefetch=0,
            grid=grid,
            in_specs=[pl.BlockSpec((bt * S, H), lambda b: (b, 0))]   # x rows
                     + [full(a) for a in inputs[1:]],                # residents
            out_specs=pl.BlockSpec((bt, H), lambda b: (b, 0)),       # lane-dense
        ),
        compiler_params=pltpu.CompilerParams(
            dimension_semantics=("parallel",),      # megacore on v7x
            vmem_limit_bytes=32 * 1024 * 1024),
    )(*inputs)
    return out[:B]


def reference(x, labels, p):
    """Pure-JAX f32 reference of the PyTorch forward (dropout == identity)."""
    sig = jax.nn.sigmoid
    it = sig(x @ p["w_it"] + p["b_it"][0])                      # (B, S, D)
    ia = sig(x @ p["w_ia"] + p["b_ia"][0])                      # (B, S, D)
    lt = sig(labels @ p["w_lt"] + p["b_lt"][0])                 # (L, D)
    la = sig(labels @ p["w_la"] + p["b_la"][0])                 # (L, D)
    scores = jnp.einsum("bsd,ld->bsl", ia * p["ctx"][0], la)    # (B, S, L)
    attn = jax.nn.softmax(scores, axis=-1)
    al = jnp.einsum("bsl,ld->bsd", attn, lt)                    # (B, S, D)
    fusion = jnp.sum(it * al, axis=1)                           # (B, D)
    return fusion @ p["w_pool"]                                 # (B, H)


def make_params(key, hidden_dim, intermediate_dim):
    ks = jax.random.split(key, 11)
    def lin(kw, kb, din, dout):
        w = jax.random.uniform(kw, (din, dout), jnp.float32, -0.1, 0.1)
        b = jax.random.uniform(kb, (1, dout), jnp.float32, -0.1, 0.1)
        return w, b
    w_it, b_it = lin(ks[0], ks[1], hidden_dim, intermediate_dim)
    w_lt, b_lt = lin(ks[2], ks[3], hidden_dim, intermediate_dim)
    w_ia, b_ia = lin(ks[4], ks[5], hidden_dim, intermediate_dim)
    w_la, b_la = lin(ks[6], ks[7], hidden_dim, intermediate_dim)
    w_pool = jax.random.uniform(ks[8], (intermediate_dim, hidden_dim),
                                jnp.float32, -0.1, 0.1)          # no bias
    ctx = jax.random.uniform(ks[9], (1, intermediate_dim), jnp.float32, 0.0, 1.0)
    return dict(w_it=w_it, b_it=b_it, w_lt=w_lt, b_lt=b_lt,
                w_ia=w_ia, b_ia=b_ia, w_la=w_la, b_la=b_la,
                w_pool=w_pool, ctx=ctx)


if __name__ == "__main__":
    B, S, L = 2, 8, 8
    H, D = 32, 32

    key = jax.random.PRNGKey(0)
    k_x, k_lab, k_p = jax.random.split(key, 3)
    x = jax.random.normal(k_x, (B, S, H), jnp.float32)
    labels = jax.random.normal(k_lab, (L, H), jnp.float32)
    params = make_params(k_p, H, D)

    out = bilinear_attention_fusion(x, labels, params)
    out = jax.block_until_ready(out)

    ref = reference(x, labels, params)
    assert out.shape == (B, H)
    # Tolerance relaxed vs. the f32 reference: MXU operands are bf16
    # (f32 accumulation) and the softmax uses the approximate EUP reciprocal.
    assert jnp.allclose(out, ref, atol=5e-2, rtol=5e-2), "mismatch vs reference"

    print("KERNEL_OK")
</pallas_src>

<mosaic_0001>
module attributes {stable_mosaic.version = 11 : i64} {
  func.func @_baf_kernel(%arg0: i32, %arg1: memref<16x32xbf16, #tpu.memory_space<vmem>>, %arg2: memref<8x32xbf16, #tpu.memory_space<vmem>>, %arg3: memref<8x32xbf16, #tpu.memory_space<vmem>>, %arg4: memref<32x32xbf16, #tpu.memory_space<vmem>>, %arg5: memref<1x32xf32, #tpu.memory_space<vmem>>, %arg6: memref<32x32xbf16, #tpu.memory_space<vmem>>, %arg7: memref<1x32xf32, #tpu.memory_space<vmem>>, %arg8: memref<32x32xbf16, #tpu.memory_space<vmem>>, %arg9: memref<2x32xf32, #tpu.memory_space<vmem>>) attributes {dimension_semantics = [#tpu.dimension_semantics<parallel>], iteration_bounds = array<i64: 1>, scalar_prefetch = 0 : i64, scratch_operands = 0 : i64, tpu.core_type = #tpu.core_type<tc>, window_params = [{transform_indices = @transform_0, window_bounds = array<i64: 16, 32>}, {pipeline_mode = #tpu.pipeline_mode<synchronous>, transform_indices = @transform_1, window_bounds = array<i64: 8, 32>}, {pipeline_mode = #tpu.pipeline_mode<synchronous>, transform_indices = @transform_2, window_bounds = array<i64: 8, 32>}, {pipeline_mode = #tpu.pipeline_mode<synchronous>, transform_indices = @transform_3, window_bounds = array<i64: 32, 32>}, {pipeline_mode = #tpu.pipeline_mode<synchronous>, transform_indices = @transform_4, window_bounds = array<i64: 1, 32>}, {pipeline_mode = #tpu.pipeline_mode<synchronous>, transform_indices = @transform_5, window_bounds = array<i64: 32, 32>}, {pipeline_mode = #tpu.pipeline_mode<synchronous>, transform_indices = @transform_6, window_bounds = array<i64: 1, 32>}, {pipeline_mode = #tpu.pipeline_mode<synchronous>, transform_indices = @transform_7, window_bounds = array<i64: 32, 32>}, {transform_indices = @transform_8, window_bounds = array<i64: 2, 32>}]} {
    %c0 = arith.constant 0 : index
    %c0_0 = arith.constant 0 : index
    %0 = vector.load %arg1[%c0, %c0_0] : memref<16x32xbf16, #tpu.memory_space<vmem>>, vector<16x32xbf16>
    %c0_1 = arith.constant 0 : index
    %c0_2 = arith.constant 0 : index
    %1 = vector.load %arg4[%c0_1, %c0_2] : memref<32x32xbf16, #tpu.memory_space<vmem>>, vector<32x32xbf16>
    %cst = arith.constant dense<0.000000e+00> : vector<16x32xf32>
    %2 = tpu.matmul %0, %1, %cst {dimension_numbers = #tpu.dot_dimension_numbers<[1], [0], [0], [1], [0, 0, 1, 1], [], []>} : vector<16x32xbf16>, vector<32x32xbf16>, vector<16x32xf32> -> vector<16x32xf32>
    %c0_3 = arith.constant 0 : index
    %c0_4 = arith.constant 0 : index
    %3 = vector.load %arg5[%c0_3, %c0_4] : memref<1x32xf32, #tpu.memory_space<vmem>>, vector<1x32xf32>
    %4 = vector.broadcast %3 : vector<1x32xf32> to vector<16x32xf32>
    %5 = arith.addf %2, %4 : vector<16x32xf32>
    %6 = arith.negf %5 : vector<16x32xf32>
    %7 = math.exp %6 : vector<16x32xf32>
    %cst_5 = arith.constant 1.000000e+00 : f32
    %8 = vector.broadcast %cst_5 : f32 to vector<16x32xf32>
    %9 = arith.addf %8, %7 : vector<16x32xf32>
    %10 = arith.divf %8, %9 : vector<16x32xf32>
    %c0_6 = arith.constant 0 : index
    %c0_7 = arith.constant 0 : index
    %11 = vector.load %arg6[%c0_6, %c0_7] : memref<32x32xbf16, #tpu.memory_space<vmem>>, vector<32x32xbf16>
    %cst_8 = arith.constant dense<0.000000e+00> : vector<16x32xf32>
    %12 = tpu.matmul %0, %11, %cst_8 {dimension_numbers = #tpu.dot_dimension_numbers<[1], [0], [0], [1], [0, 0, 1, 1], [], []>} : vector<16x32xbf16>, vector<32x32xbf16>, vector<16x32xf32> -> vector<16x32xf32>
    %c0_9 = arith.constant 0 : index
    %c0_10 = arith.constant 0 : index
    %13 = vector.load %arg7[%c0_9, %c0_10] : memref<1x32xf32, #tpu.memory_space<vmem>>, vector<1x32xf32>
    %14 = vector.broadcast %13 : vector<1x32xf32> to vector<16x32xf32>
    %15 = arith.addf %12, %14 : vector<16x32xf32>
    %16 = arith.negf %15 : vector<16x32xf32>
    %17 = math.exp %16 : vector<16x32xf32>
    %cst_11 = arith.constant 1.000000e+00 : f32
    %18 = vector.broadcast %cst_11 : f32 to vector<16x32xf32>
    %19 = arith.addf %18, %17 : vector<16x32xf32>
    %20 = arith.divf %18, %19 : vector<16x32xf32>
    %21 = arith.truncf %20 : vector<16x32xf32> to vector<16x32xbf16>
    %c0_12 = arith.constant 0 : index
    %c0_13 = arith.constant 0 : index
    %22 = vector.load %arg3[%c0_12, %c0_13] : memref<8x32xbf16, #tpu.memory_space<vmem>>, vector<8x32xbf16>
    %cst_14 = arith.constant dense<0.000000e+00> : vector<16x8xf32>
    %23 = tpu.matmul %21, %22, %cst_14 {dimension_numbers = #tpu.dot_dimension_numbers<[1], [1], [0], [0], [0, 0, 1, 0], [], []>} : vector<16x32xbf16>, vector<8x32xbf16>, vector<16x8xf32> -> vector<16x8xf32>
    %cst_15 = arith.constant dense<0xFF800000> : vector<16xf32>
    %24 = vector.multi_reduction <maximumf>, %23, %cst_15 [1] : vector<16x8xf32> to vector<16xf32>
    %25 = vector.shape_cast %24 : vector<16xf32> to vector<16x1xf32>
    %26 = vector.broadcast %25 : vector<16x1xf32> to vector<16x8xf32>
    %27 = arith.subf %23, %26 : vector<16x8xf32>
    %28 = math.exp %27 : vector<16x8xf32>
    %cst_16 = arith.constant dense<0.000000e+00> : vector<16xf32>
    %29 = vector.multi_reduction <add>, %28, %cst_16 [1] : vector<16x8xf32> to vector<16xf32>
    %30 = vector.shape_cast %29 : vector<16xf32> to vector<16x1xf32>
    %31 = tpu.reciprocal %30 {approx = true} : vector<16x1xf32> -> vector<16x1xf32>
    %32 = vector.broadcast %31 : vector<16x1xf32> to vector<16x8xf32>
    %33 = arith.mulf %28, %32 : vector<16x8xf32>
    %34 = arith.truncf %33 : vector<16x8xf32> to vector<16x8xbf16>
    %c0_17 = arith.constant 0 : index
    %c0_18 = arith.constant 0 : index
    %35 = vector.load %arg2[%c0_17, %c0_18] : memref<8x32xbf16, #tpu.memory_space<vmem>>, vector<8x32xbf16>
    %cst_19 = arith.constant dense<0.000000e+00> : vector<16x32xf32>
    %36 = tpu.matmul %34, %35, %cst_19 {dimension_numbers = #tpu.dot_dimension_numbers<[1], [0], [0], [1], [0, 0, 1, 1], [], []>} : vector<16x8xbf16>, vector<8x32xbf16>, vector<16x32xf32> -> vector<16x32xf32>
    %37 = arith.mulf %10, %36 : vector<16x32xf32>
    %38 = vector.shape_cast %37 : vector<16x32xf32> to vector<2x8x32xf32>
    %cst_20 = arith.constant dense<0.000000e+00> : vector<2x32xf32>
    %39 = vector.multi_reduction <add>, %38, %cst_20 [1] : vector<2x8x32xf32> to vector<2x32xf32>
    %40 = arith.truncf %39 : vector<2x32xf32> to vector<2x32xbf16>
    %c0_21 = arith.constant 0 : index
    %c0_22 = arith.constant 0 : index
    %41 = vector.load %arg8[%c0_21, %c0_22] : memref<32x32xbf16, #tpu.memory_space<vmem>>, vector<32x32xbf16>
    %cst_23 = arith.constant dense<0.000000e+00> : vector<2x32xf32>
    %42 = tpu.matmul %40, %41, %cst_23 {dimension_numbers = #tpu.dot_dimension_numbers<[1], [0], [0], [1], [0, 0, 1, 1], [], []>} : vector<2x32xbf16>, vector<32x32xbf16>, vector<2x32xf32> -> vector<2x32xf32>
    %c0_24 = arith.constant 0 : index
    %c0_25 = arith.constant 0 : index
    %43 = vector.load %arg9[%c0_24, %c0_25] : memref<2x32xf32, #tpu.memory_space<vmem>>, vector<2x32xf32>
    tpu.vector_store %arg9[%c0_24, %c0_25], %42 {strides = array<i32>} : memref<2x32xf32, #tpu.memory_space<vmem>>, vector<2x32xf32>,
    return
  }
  func.func @transform_0(%arg0: i32) -> (i32, i32) {
    %c0_i32 = arith.constant 0 : i32
    %c0_i32_0 = arith.constant 0 : i32
    return %arg0, %c0_i32 : i32, i32
  }
  func.func @transform_1(%arg0: i32) -> (i32, i32) {
    %c0_i32 = arith.constant 0 : i32
    %c0_i32_0 = arith.constant 0 : i32
    %c0_i32_1 = arith.constant 0 : i32
    return %c0_i32, %c0_i32_0 : i32, i32
  }
  func.func @transform_2(%arg0: i32) -> (i32, i32) {
    %c0_i32 = arith.constant 0 : i32
    %c0_i32_0 = arith.constant 0 : i32
    %c0_i32_1 = arith.constant 0 : i32
    return %c0_i32, %c0_i32_0 : i32, i32
  }
  func.func @transform_3(%arg0: i32) -> (i32, i32) {
    %c0_i32 = arith.constant 0 : i32
    %c0_i32_0 = arith.constant 0 : i32
    %c0_i32_1 = arith.constant 0 : i32
    return %c0_i32, %c0_i32_0 : i32, i32
  }
  func.func @transform_4(%arg0: i32) -> (i32, i32) {
    %c0_i32 = arith.constant 0 : i32
    %c0_i32_0 = arith.constant 0 : i32
    %c0_i32_1 = arith.constant 0 : i32
    return %c0_i32, %c0_i32_0 : i32, i32
  }
  func.func @transform_5(%arg0: i32) -> (i32, i32) {
    %c0_i32 = arith.constant 0 : i32
    %c0_i32_0 = arith.constant 0 : i32
    %c0_i32_1 = arith.constant 0 : i32
    return %c0_i32, %c0_i32_0 : i32, i32
  }
  func.func @transform_6(%arg0: i32) -> (i32, i32) {
    %c0_i32 = arith.constant 0 : i32
    %c0_i32_0 = arith.constant 0 : i32
    %c0_i32_1 = arith.constant 0 : i32
    return %c0_i32, %c0_i32_0 : i32, i32
  }
  func.func @transform_7(%arg0: i32) -> (i32, i32) {
    %c0_i32 = arith.constant 0 : i32
    %c0_i32_0 = arith.constant 0 : i32
    %c0_i32_1 = arith.constant 0 : i32
    return %c0_i32, %c0_i32_0 : i32, i32
  }
  func.func @transform_8(%arg0: i32) -> (i32, i32) {
    %c0_i32 = arith.constant 0 : i32
    %c0_i32_0 = arith.constant 0 : i32
    return %arg0, %c0_i32 : i32, i32
  }
}

</mosaic_0001>

<llo_original>
// kernel: tpu_custom_call.1
$region0: #{tpu_custom_call.1}
  #allocation0 [shape = 'u32[]', space=smem, size = 0x4, offset = 0x4, fixed_abs, tag = 'smem constant byte address 0x4 - core index']
  #allocation1 [shape = 'u32[144,128]{1,0:T(1,128)}', space=vmem, size = 0x12000, scoped, tag = 'internal scratch']
  %s0 = inlined_call_operand.hbm [shape: bf16[16,32], index: 0, kind: input, shape index: {}]
  %s1 = inlined_call_operand.hbm [shape: bf16[8,32], index: 1, kind: input, shape index: {}]
  %s2 = inlined_call_operand.hbm [shape: bf16[8,32], index: 2, kind: input, shape index: {}]
  %s3 = inlined_call_operand.hbm [shape: bf16[32,32], index: 3, kind: input, shape index: {}]
  %s4 = inlined_call_operand.vmem [shape: f32[1,32], index: 4, kind: input, shape index: {}]
  %s5 = inlined_call_operand.hbm [shape: bf16[32,32], index: 5, kind: input, shape index: {}]
  %s6 = inlined_call_operand.vmem [shape: f32[1,32], index: 6, kind: input, shape index: {}]
  %s7 = inlined_call_operand.hbm [shape: bf16[32,32], index: 7, kind: input, shape index: {}]
  %s8 = inlined_call_operand.hbm [shape: f32[2,32], index: 8, kind: output, shape index: {}]
  %s9 = sld [smem:[#allocation0]]
  $region66: #{tpu_custom_call.1} parent=0
    _
  %s11 = ssub.s32 1, %s9
  %s12 = scalar_select 0, %s11, %s9
  $region1: #{tpu_custom_call.1} parent=0
    #allocation2 [shape = 'u8[4096]{0}', space=vmem, size = 0x1000, scoped, tag = 'input window, operand 0, single buffered']
    #allocation3 [shape = 's32[1]{0}', space=sflag, size = 0x4, scoped, tag = 'scoped memory for tpu_custom_call.1']
    #allocation4 [shape = 's32[1]{0}', space=sflag, size = 0x4, scoped, tag = 'scoped memory for tpu_custom_call.1']
    #allocation5 [shape = 'u8[2048]{0}', space=vmem, size = 0x800, scoped, tag = 'input window, operand 1, single buffered']
    #allocation6 [shape = 's32[1]{0}', space=sflag, size = 0x4, scoped, tag = 'scoped memory for tpu_custom_call.1']
    #allocation7 [shape = 'u8[2048]{0}', space=vmem, size = 0x800, scoped, tag = 'input window, operand 2, single buffered']
    #allocation8 [shape = 'u8[8192]{0}', space=vmem, size = 0x2000, scoped, tag = 'input window, operand 3, single buffered']
    #allocation9 [shape = 's32[1]{0}', space=sflag, size = 0x4, scoped, tag = 'scoped memory for tpu_custom_call.1']
    #allocation10 [shape = 'u8[8192]{0}', space=vmem, size = 0x2000, scoped, tag = 'input window, operand 5, single buffered']
    #allocation11 [shape = 'u8[8192]{0}', space=vmem, size = 0x2000, scoped, tag = 'input window, operand 7, single buffered']
    #allocation12 [shape = 's32[1]{0}', space=sflag, size = 0x4, scoped, tag = 'scoped memory for tpu_custom_call.1']
    #allocation13 [shape = 'u8[1024]{0}', space=vmem, size = 0x400, scoped, tag = 'output window, operand 0, single buffered']
    %13 = vsyncpa [#allocation3], 0
    %14 = vsyncpa [#allocation6], 0
    %15 = vsyncpa [#allocation9], 0
    %16 = vsyncpa [#allocation12], 0
    %17 = vsyncpa [#allocation4], 0
    // Predicated region
    $region2: #{tpu_custom_call.1} parent=1 // pred_check
      _
    $region3: #{tpu_custom_call.1} parent=1 // pred_check_branch
      %19 = sbr.rel (0) target = $region5
    $region4: #{tpu_custom_call.1} parent=1 // pred_region
      %s21 = ssub.s32 128, 128
      %22 = vsyncadd [#allocation3], %s21
      %s23 = sshll.u32 [#allocation2], 4
      %s24 = int_to_ptr.vmem [resolvable:$true] %s23
      %29 = dma.hbm_to_vmem [thread:$0]  %s0, 128, %s24, [#allocation3], 64, 64, 4
    $region5: #{tpu_custom_call.1} parent=1 // pred_fallthru
      _
    // Predicated region
    $region6: #{tpu_custom_call.1} parent=1 // pred_check
      _
    $region7: #{tpu_custom_call.1} parent=1 // pred_check_branch
      %31 = sbr.rel (0) target = $region9
    $region8: #{tpu_custom_call.1} parent=1 // pred_region
      %s33 = ssub.s32 64, 64
      %34 = vsyncadd [#allocation6], %s33
      %s36 = sshll.u32 [#allocation5], 4
      %s37 = int_to_ptr.vmem [resolvable:$true] %s36
      %39 = dma.hbm_to_vmem [thread:$0]  %s1, 64, %s37, [#allocation6]
    $region9: #{tpu_custom_call.1} parent=1 // pred_fallthru
      _
    // Predicated region
    $region10: #{tpu_custom_call.1} parent=1 // pred_check
      _
    $region11: #{tpu_custom_call.1} parent=1 // pred_check_branch
      %41 = sbr.rel (0) target = $region13
    $region12: #{tpu_custom_call.1} parent=1 // pred_region
      %s43 = ssub.s32 64, 64
      %44 = vsyncadd [#allocation6], %s43
      %s46 = sshll.u32 [#allocation7], 4
      %s47 = int_to_ptr.vmem [resolvable:$true] %s46
      %49 = dma.hbm_to_vmem [thread:$0]  %s2, 64, %s47, [#allocation6]
    $region13: #{tpu_custom_call.1} parent=1 // pred_fallthru
      _
    // Predicated region
    $region14: #{tpu_custom_call.1} parent=1 // pred_check
      _
    $region15: #{tpu_custom_call.1} parent=1 // pred_check_branch
      %51 = sbr.rel (0) target = $region17
    $region16: #{tpu_custom_call.1} parent=1 // pred_region
      %s53 = ssub.s32 256, 256
      %54 = vsyncadd [#allocation9], %s53
      %s55 = sshll.u32 [#allocation8], 4
      %s56 = int_to_ptr.vmem [resolvable:$true] %s55
      %61 = dma.hbm_to_vmem [thread:$0]  %s3, 256, %s56, [#allocation9], 64, 64, 4
    $region17: #{tpu_custom_call.1} parent=1 // pred_fallthru
      _
    // Predicated region
    $region18: #{tpu_custom_call.1} parent=1 // pred_check
      _
    $region19: #{tpu_custom_call.1} parent=1 // pred_check_branch
      %63 = sbr.rel (0) target = $region21
    $region20: #{tpu_custom_call.1} parent=1 // pred_region
      _
    $region21: #{tpu_custom_call.1} parent=1 // pred_fallthru
      _
    // Predicated region
    $region22: #{tpu_custom_call.1} parent=1 // pred_check
      _
    $region23: #{tpu_custom_call.1} parent=1 // pred_check_branch
      %65 = sbr.rel (0) target = $region25
    $region24: #{tpu_custom_call.1} parent=1 // pred_region
      %s67 = ssub.s32 256, 256
      %68 = vsyncadd [#allocation9], %s67
      %s69 = sshll.u32 [#allocation10], 4
      %s70 = int_to_ptr.vmem [resolvable:$true] %s69
      %75 = dma.hbm_to_vmem [thread:$0]  %s5, 256, %s70, [#allocation9], 64, 64, 4
    $region25: #{tpu_custom_call.1} parent=1 // pred_fallthru
      _
    // Predicated region
    $region26: #{tpu_custom_call.1} parent=1 // pred_check
      _
    $region27: #{tpu_custom_call.1} parent=1 // pred_check_branch
      %77 = sbr.rel (0) target = $region29
    $region28: #{tpu_custom_call.1} parent=1 // pred_region
      _
    $region29: #{tpu_custom_call.1} parent=1 // pred_fallthru
      _
    // Predicated region
    $region30: #{tpu_custom_call.1} parent=1 // pred_check
      _
    $region31: #{tpu_custom_call.1} parent=1 // pred_check_branch
      %79 = sbr.rel (0) target = $region33
    $region32: #{tpu_custom_call.1} parent=1 // pred_region
      %s81 = ssub.s32 256, 256
      %82 = vsyncadd [#allocation12], %s81
      %s83 = sshll.u32 [#allocation11], 4
      %s84 = int_to_ptr.vmem [resolvable:$true] %s83
      %89 = dma.hbm_to_vmem [thread:$0]  %s7, 256, %s84, [#allocation12], 64, 64, 4
    $region33: #{tpu_custom_call.1} parent=1 // pred_fallthru
      _
    // Predicated region
    $region34: #{tpu_custom_call.1} parent=1 // pred_check
      _
    $region35: #{tpu_custom_call.1} parent=1 // pred_check_branch
      %91 = sbr.rel (0) target = $region37
    $region36: #{tpu_custom_call.1} parent=1 // pred_region
      %92 = dma.done [#allocation3], 128
    $region37: #{tpu_custom_call.1} parent=1 // pred_fallthru
      _
    // Predicated region
    $region38: #{tpu_custom_call.1} parent=1 // pred_check
      _
    $region39: #{tpu_custom_call.1} parent=1 // pred_check_branch
      %94 = sbr.rel (0) target = $region41
    $region40: #{tpu_custom_call.1} parent=1 // pred_region
      %95 = dma.done [#allocation6], 64
    $region41: #{tpu_custom_call.1} parent=1 // pred_fallthru
      _
    // Predicated region
    $region42: #{tpu_custom_call.1} parent=1 // pred_check
      _
    $region43: #{tpu_custom_call.1} parent=1 // pred_check_branch
      %97 = sbr.rel (0) target = $region45
    $region44: #{tpu_custom_call.1} parent=1 // pred_region
      %98 = dma.done [#allocation6], 64
    $region45: #{tpu_custom_call.1} parent=1 // pred_fallthru
      _
    // Predicated region
    $region46: #{tpu_custom_call.1} parent=1 // pred_check
      _
    $region47: #{tpu_custom_call.1} parent=1 // pred_check_branch
      %100 = sbr.rel (0) target = $region49
    $region48: #{tpu_custom_call.1} parent=1 // pred_region
      %101 = dma.done [#allocation9], 256
    $region49: #{tpu_custom_call.1} parent=1 // pred_fallthru
      _
    // Predicated region
    $region50: #{tpu_custom_call.1} parent=1 // pred_check
      _
    $region51: #{tpu_custom_call.1} parent=1 // pred_check_branch
      %103 = sbr.rel (0) target = $region53
    $region52: #{tpu_custom_call.1} parent=1 // pred_region
      %104 = dma.done [#allocation9], 256
    $region53: #{tpu_custom_call.1} parent=1 // pred_fallthru
      _
    // Predicated region
    $region54: #{tpu_custom_call.1} parent=1 // pred_check
      _
    $region55: #{tpu_custom_call.1} parent=1 // pred_check_branch
      %106 = sbr.rel (0) target = $region57
    $region56: #{tpu_custom_call.1} parent=1 // pred_region
      %107 = dma.done [#allocation12], 256
    $region57: #{tpu_custom_call.1} parent=1 // pred_fallthru
      _
    %v109 = vld [vmem:[#allocation2] sm:$0xf]
    %v110 = vld [vmem:[#allocation2 + $0x4] sm:$0xf]
    %v111 = vld [vmem:[#allocation8] sm:$0xf]
    %v112 = vld [vmem:[#allocation8 + $0x4] sm:$0xf]
    %v113 = vld [vmem:[#allocation8 + $0x8] sm:$0xf]
    %v114 = vld [vmem:[#allocation8 + $0xc] sm:$0xf]
    %v115 = vld [vmem:[%s4] sm:$0x1]
    %v117 = vlaneseq
    %v118 = vshrl.u32 %v117, 7
    %v119 = vsub.s32 0, %v118
    %v120 = vrot.slane %v115, %v119
    %v124 = vunpack.c.l.b16 %v109
    %v125 = vunpack.c.l.b16 %v110
    %v126 = vpack.c.b16 %v125, %v124
    %v131 = vunpack.c.l.b16 %v111
    %v132 = vunpack.c.l.b16 %v112
    %v133 = vunpack.c.l.b16 %v113
    %v134 = vunpack.c.l.b16 %v114
    %v135 = vpack.c.b16 %v132, %v131
    %v136 = vpack.c.b16 %v134, %v133
    %vm139 = vcmask 261120
    %v141 = vsel %vm139, %v126, 0
    %143 = vmatprep.subr.bf16.mxu0 0
    %144 = vmatpush1.bf16.msra.mxu0 0
    %145 = vmatprep.subr.bf16.mxu0 0
    %146 = vmatpush1.bf16.msra.mxu0 0
    %147 = vmatprep.subr.bf16.mxu0 0
    %148 = vmatpush1.bf16.msra.mxu0 0
    %149 = vmatprep.subr.bf16.mxu0 0
    %150 = vmatpush1.bf16.msra.mxu0 0
    %151 = vmatprep.subr.bf16.mxu0 0
    %152 = vmatpush1.bf16.msra.mxu0 0
    %153 = vmatprep.subr.bf16.mxu0 0
    %154 = vmatpush1.bf16.msra.mxu0 0
    %155 = vmatprep.subr.bf16.mxu0 0
    %156 = vmatpush1.bf16.msra.mxu0 %v136
    %157 = vmatprep.subr.bf16.mxu0 0
    %158 = vmatpush1.bf16.msra.mxu0 %v135
    %159 = vmatprep.subr.bf16.mxu0 0
    %160 = vmatpush2.bf16.msra.mxu0 0
    %161 = vmatprep.subr.bf16.mxu0 0
    %162 = vmatpush2.bf16.msra.mxu0 0
    %163 = vmatprep.subr.bf16.mxu0 0
    %164 = vmatpush2.bf16.msra.mxu0 0
    %165 = vmatprep.subr.bf16.mxu0 0
    %166 = vmatpush2.bf16.msra.mxu0 0
    %167 = vmatprep.subr.bf16.mxu0 0
    %168 = vmatpush2.bf16.msra.mxu0 0
    %169 = vmatprep.subr.bf16.mxu0 0
    %170 = vmatpush2.bf16.msra.mxu0 0
    %171 = vmatprep.subr.bf16.mxu0 0
    %172 = vmatpush2.bf16.msra.mxu0 0
    %173 = vmatprep.subr.bf16.mxu0 0
    %174 = vmatpush2.bf16.msra.mxu0 0
    %175 = vmatprep.mubr.bf16.mxu0 0
    %176 = vmatmul.mubr.bf16.gmra.mxu0 %v141
    %v177 = vpop.f32.mrf.mxu0
    %v178 = vadd.f32 %v120, %v177
    %v179 = vpop.f32.mrf.mxu0
    %v180 = vpop.f32.mrf.mxu0
    %v181 = vadd.f32 %v120, %v180
    %v182 = vpop.f32.mrf.mxu0
    %183 = vdwg.mxu0
    %v184 = vxor.u32 %v178, 2147483648
    %v185 = vxor.u32 %v181, 2147483648
    %v186 = vmul.f32 %v184, 1.442695
    %v187 = vpow.pop %v186
    %v188 = vmul.f32 %v185, 1.442695
    %v189 = vpow.pop %v188
    %v190 = vadd.f32 %v187, 1.0
    %v191 = vadd.f32 %v189, 1.0
    %v192 = vrcp.pop %v190
    %v193 = vmul.f32 1.0, %v192
    %v194 = vrcp.pop %v191
    %v195 = vmul.f32 1.0, %v194
    %v196 = vld [vmem:[#allocation10] sm:$0xf]
    %v197 = vld [vmem:[#allocation10 + $0x4] sm:$0xf]
    %v198 = vld [vmem:[#allocation10 + $0x8] sm:$0xf]
    %v199 = vld [vmem:[#allocation10 + $0xc] sm:$0xf]
    %v200 = vld [vmem:[%s6] sm:$0x1]
    %v202 = vlaneseq
    %v203 = vshrl.u32 %v202, 7
    %v204 = vsub.s32 0, %v203
    %v205 = vrot.slane %v200, %v204
    %v211 = vunpack.c.l.b16 %v196
    %v212 = vunpack.c.l.b16 %v197
    %v213 = vunpack.c.l.b16 %v198
    %v214 = vunpack.c.l.b16 %v199
    %v215 = vpack.c.b16 %v212, %v211
    %v216 = vpack.c.b16 %v214, %v213
    %219 = vmatprep.subr.bf16.mxu0 0
    %220 = vmatpush1.bf16.msra.mxu0 0
    %221 = vmatprep.subr.bf16.mxu0 0
    %222 = vmatpush1.bf16.msra.mxu0 0
    %223 = vmatprep.subr.bf16.mxu0 0
    %224 = vmatpush1.bf16.msra.mxu0 0
    %225 = vmatprep.subr.bf16.mxu0 0
    %226 = vmatpush1.bf16.msra.mxu0 0
    %227 = vmatprep.subr.bf16.mxu0 0
    %228 = vmatpush1.bf16.msra.mxu0 0
    %229 = vmatprep.subr.bf16.mxu0 0
    %230 = vmatpush1.bf16.msra.mxu0 0
    %231 = vmatprep.subr.bf16.mxu0 0
    %232 = vmatpush1.bf16.msra.mxu0 %v216
    %233 = vmatprep.subr.bf16.mxu0 0
    %234 = vmatpush1.bf16.msra.mxu0 %v215
    %235 = vmatprep.subr.bf16.mxu0 0
    %236 = vmatpush2.bf16.msra.mxu0 0
    %237 = vmatprep.subr.bf16.mxu0 0
    %238 = vmatpush2.bf16.msra.mxu0 0
    %239 = vmatprep.subr.bf16.mxu0 0
    %240 = vmatpush2.bf16.msra.mxu0 0
    %241 = vmatprep.subr.bf16.mxu0 0
    %242 = vmatpush2.bf16.msra.mxu0 0
    %243 = vmatprep.subr.bf16.mxu0 0
    %244 = vmatpush2.bf16.msra.mxu0 0
    %245 = vmatprep.subr.bf16.mxu0 0
    %246 = vmatpush2.bf16.msra.mxu0 0
    %247 = vmatprep.subr.bf16.mxu0 0
    %248 = vmatpush2.bf16.msra.mxu0 0
    %249 = vmatprep.subr.bf16.mxu0 0
    %250 = vmatpush2.bf16.msra.mxu0 0
    %251 = vmatprep.mubr.bf16.mxu0 0
    %252 = vmatmul.mubr.bf16.gmra.mxu0 %v141
    %v253 = vpop.f32.mrf.mxu0
    %v254 = vadd.f32 %v205, %v253
    %v255 = vpop.f32.mrf.mxu0
    %v256 = vpop.f32.mrf.mxu0
    %v257 = vadd.f32 %v205, %v256
    %v258 = vpop.f32.mrf.mxu0
    %259 = vdwg.mxu0
    %v260 = vxor.u32 %v254, 2147483648
    %v261 = vxor.u32 %v257, 2147483648
    %v262 = vmul.f32 %v260, 1.442695
    %v263 = vpow.pop %v262
    %v264 = vmul.f32 %v261, 1.442695
    %v265 = vpow.pop %v264
    %v266 = vadd.f32 %v263, 1.0
    %v267 = vadd.f32 %v265, 1.0
    %v268 = vrcp.pop %v266
    %v269 = vmul.f32 1.0, %v268
    %v270 = vrcp.pop %v267
    %v271 = vmul.f32 1.0, %v270
    %v272 = vpack.c.bf16 %v271, %v269
    %v273 = vld [vmem:[#allocation7] sm:$0xf]
    %v275 = vsel %vm139, %v272, 0
    %v278 = vsel %vm139, %v273, 0
    %280 = vmatprep.subr.bf16.mxu0 0
    %281 = vmatpush1.bf16.xpose.msra.mxu0 0
    %282 = vmatprep.subr.bf16.mxu0 0
    %283 = vmatpush1.bf16.xpose.msra.mxu0 0
    %284 = vmatprep.subr.bf16.mxu0 0
    %285 = vmatpush1.bf16.xpose.msra.mxu0 0
    %286 = vmatprep.subr.bf16.mxu0 0
    %287 = vmatpush1.bf16.xpose.msra.mxu0 0
    %288 = vmatprep.subr.bf16.mxu0 0
    %289 = vmatpush1.bf16.xpose.msra.mxu0 0
    %290 = vmatprep.subr.bf16.mxu0 0
    %291 = vmatpush1.bf16.xpose.msra.mxu0 0
    %292 = vmatprep.subr.bf16.mxu0 0
    %293 = vmatpush1.bf16.xpose.msra.mxu0 0
    %294 = vmatprep.subr.bf16.mxu0 0
    %295 = vmatpush1.bf16.xpose.msra.mxu0 %v278
    %296 = vmatprep.subr.bf16.mxu0 0
    %297 = vmatpush2.bf16.xpose.msra.mxu0 0
    %298 = vmatprep.subr.bf16.mxu0 0
    %299 = vmatpush2.bf16.xpose.msra.mxu0 0
    %300 = vmatprep.subr.bf16.mxu0 0
    %301 = vmatpush2.bf16.xpose.msra.mxu0 0
    %302 = vmatprep.subr.bf16.mxu0 0
    %303 = vmatpush2.bf16.xpose.msra.mxu0 0
    %304 = vmatprep.subr.bf16.mxu0 0
    %305 = vmatpush2.bf16.xpose.msra.mxu0 0
    %306 = vmatprep.subr.bf16.mxu0 0
    %307 = vmatpush2.bf16.xpose.msra.mxu0 0
    %308 = vmatprep.subr.bf16.mxu0 0
    %309 = vmatpush2.bf16.xpose.msra.mxu0 0
    %310 = vmatprep.subr.bf16.mxu0 0
    %311 = vmatpush2.bf16.xpose.msra.mxu0 0
    %312 = vmatprep.mubr.bf16.mxu0 0
    %313 = vmatmul.mubr.bf16.gmra.mxu0 %v275
    %v314 = vpop.f32.mrf.mxu0
    %v315 = vadd.f32 0.0, %v314
    %v316 = vpop.f32.mrf.mxu0
    %v317 = vpop.f32.mrf.mxu0
    %v318 = vadd.f32 0.0, %v317
    %v319 = vpop.f32.mrf.mxu0
    %320 = vdwg.mxu0
    %vm321 = vcmask 64512
    %v322 = vsel %vm321, %v315, -inf
    %323 = vmax.xlane.f32.xlu0 %v322
    %v324 = vpop.xlane.xlu0 %323
    %v325 = vsel %vm321, %v318, -inf
    %326 = vmax.xlane.f32.xlu0 %v325
    %v327 = vpop.xlane.xlu0 %326
    %v328 = vsub.f32 %v315, %v324
    %v329 = vsub.f32 %v318, %v327
    %v330 = vmul.f32 %v328, 1.442695
    %v331 = vpow.pop %v330
    %v332 = vmul.f32 %v329, 1.442695
    %v333 = vpow.pop %v332
    %v334 = vsel %vm321, %v331, 0.0
    %335 = vadd.xlane.f32.xlu0 %v334
    %v336 = vpop.xlane.xlu0 %335
    %v337 = vsel %vm321, %v333, 0.0
    %338 = vadd.xlane.f32.xlu0 %v337
    %v339 = vpop.xlane.xlu0 %338
    %v340 = vrcp.pop %v336
    %v341 = vrcp.pop %v339
    %v342 = vmul.f32 %v331, %v340
    %v343 = vmul.f32 %v333, %v341
    %v344 = vpack.c.bf16 %v343, %v342
    %v345 = vld [vmem:[#allocation5] sm:$0xf]
    %v347 = vsel %vm321, %v344, 0
    %vm349 = vcmask 1043456
    %v351 = vsel %vm349, %v345, 0
    %353 = vmatprep.subr.bf16.mxu0 0
    %354 = vmatpush1.bf16.msra.mxu0 0
    %355 = vmatprep.subr.bf16.mxu0 0
    %356 = vmatpush1.bf16.msra.mxu0 0
    %357 = vmatprep.subr.bf16.mxu0 0
    %358 = vmatpush1.bf16.msra.mxu0 0
    %359 = vmatprep.subr.bf16.mxu0 0
    %360 = vmatpush1.bf16.msra.mxu0 0
    %361 = vmatprep.subr.bf16.mxu0 0
    %362 = vmatpush1.bf16.msra.mxu0 0
    %363 = vmatprep.subr.bf16.mxu0 0
    %364 = vmatpush1.bf16.msra.mxu0 0
    %365 = vmatprep.subr.bf16.mxu0 0
    %366 = vmatpush1.bf16.msra.mxu0 0
    %367 = vmatprep.subr.bf16.mxu0 0
    %368 = vmatpush1.bf16.msra.mxu0 %v351
    %369 = vmatprep.subr.bf16.mxu0 0
    %370 = vmatpush2.bf16.msra.mxu0 0
    %371 = vmatprep.subr.bf16.mxu0 0
    %372 = vmatpush2.bf16.msra.mxu0 0
    %373 = vmatprep.subr.bf16.mxu0 0
    %374 = vmatpush2.bf16.msra.mxu0 0
    %375 = vmatprep.subr.bf16.mxu0 0
    %376 = vmatpush2.bf16.msra.mxu0 0
    %377 = vmatprep.subr.bf16.mxu0 0
    %378 = vmatpush2.bf16.msra.mxu0 0
    %379 = vmatprep.subr.bf16.mxu0 0
    %380 = vmatpush2.bf16.msra.mxu0 0
    %381 = vmatprep.subr.bf16.mxu0 0
    %382 = vmatpush2.bf16.msra.mxu0 0
    %383 = vmatprep.subr.bf16.mxu0 0
    %384 = vmatpush2.bf16.msra.mxu0 0
    %385 = vmatprep.mubr.bf16.mxu0 0
    %386 = vmatmul.mubr.bf16.gmra.mxu0 %v347
    %v387 = vpop.f32.mrf.mxu0
    %v388 = vadd.f32 0.0, %v387
    %v389 = vpop.f32.mrf.mxu0
    %v390 = vpop.f32.mrf.mxu0
    %v391 = vadd.f32 0.0, %v390
    %v392 = vpop.f32.mrf.mxu0
    %393 = vdwg.mxu0
    %v394 = vmul.f32 %v193, %v388
    %v395 = vmul.f32 %v195, %v391
    %v396 = vsel %vm139, %v394, 0.0
    %v397 = vrot.slane %v396, 4
    %v398 = vadd.f32 %v396, %v397
    %v399 = vrot.slane %v398, 2
    %v400 = vadd.f32 %v398, %v399
    %v401 = vrot.slane %v400, 1
    %v402 = vadd.f32 %v400, %v401
    %v403 = vsel %vm139, %v395, 0.0
    %v404 = vrot.slane %v403, 4
    %v405 = vadd.f32 %v403, %v404
    %v406 = vrot.slane %v405, 2
    %v407 = vadd.f32 %v405, %v406
    %v408 = vrot.slane %v407, 1
    %v409 = vadd.f32 %v407, %v408
    %v410 = vpack.c.bf16 %v402, %v402
    %v411 = vpack.c.bf16 %v409, %v409
    %v412 = vld [vmem:[#allocation11] sm:$0xf]
    %v413 = vld [vmem:[#allocation11 + $0x4] sm:$0xf]
    %v414 = vld [vmem:[#allocation11 + $0x8] sm:$0xf]
    %v415 = vld [vmem:[#allocation11 + $0xc] sm:$0xf]
    %v418 = vunpack.c.l.b16 %v410
    %v419 = vunpack.c.l.b16 %v411
    %vm420 = vcmask 1041409
    %v421 = vsel %vm420, %v419, %v418
    %v422 = vpack.c.b16 %v421, %v421
    %v427 = vunpack.c.l.b16 %v412
    %v428 = vunpack.c.l.b16 %v413
    %v429 = vunpack.c.l.b16 %v414
    %v430 = vunpack.c.l.b16 %v415
    %v431 = vpack.c.b16 %v428, %v427
    %v432 = vpack.c.b16 %v430, %v429
    %v436 = vsel %vm139, %v422, 0
    %438 = vmatprep.subr.bf16.mxu0 0
    %439 = vmatpush1.bf16.msra.mxu0 0
    %440 = vmatprep.subr.bf16.mxu0 0
    %441 = vmatpush1.bf16.msra.mxu0 0
    %442 = vmatprep.subr.bf16.mxu0 0
    %443 = vmatpush1.bf16.msra.mxu0 0
    %444 = vmatprep.subr.bf16.mxu0 0
    %445 = vmatpush1.bf16.msra.mxu0 0
    %446 = vmatprep.subr.bf16.mxu0 0
    %447 = vmatpush1.bf16.msra.mxu0 0
    %448 = vmatprep.subr.bf16.mxu0 0
    %449 = vmatpush1.bf16.msra.mxu0 0
    %450 = vmatprep.subr.bf16.mxu0 0
    %451 = vmatpush1.bf16.msra.mxu0 %v432
    %452 = vmatprep.subr.bf16.mxu0 0
    %453 = vmatpush1.bf16.msra.mxu0 %v431
    %454 = vmatprep.subr.bf16.mxu0 0
    %455 = vmatpush2.bf16.msra.mxu0 0
    %456 = vmatprep.subr.bf16.mxu0 0
    %457 = vmatpush2.bf16.msra.mxu0 0
    %458 = vmatprep.subr.bf16.mxu0 0
    %459 = vmatpush2.bf16.msra.mxu0 0
    %460 = vmatprep.subr.bf16.mxu0 0
    %461 = vmatpush2.bf16.msra.mxu0 0
    %462 = vmatprep.subr.bf16.mxu0 0
    %463 = vmatpush2.bf16.msra.mxu0 0
    %464 = vmatprep.subr.bf16.mxu0 0
    %465 = vmatpush2.bf16.msra.mxu0 0
    %466 = vmatprep.subr.bf16.mxu0 0
    %467 = vmatpush2.bf16.msra.mxu0 0
    %468 = vmatprep.subr.bf16.mxu0 0
    %469 = vmatpush2.bf16.msra.mxu0 0
    %470 = vmatprep.mubr.bf16.mxu0 0
    %471 = vmatmul.mubr.bf16.gmra.mxu0 %v436
    %v472 = vpop.f32.mrf.mxu0
    %v473 = vadd.f32 0.0, %v472
    %v474 = vpop.f32.mrf.mxu0
    %v475 = vpop.f32.mrf.mxu0
    %v476 = vpop.f32.mrf.mxu0
    %477 = vdwg.mxu0
    %vm478 = vcmask 254976
    %479 = vst.msk [vmem:[#allocation13] sm:$0x3] %vm478, %v473
    // Predicated region
    $region58: #{tpu_custom_call.1} parent=1 // pred_check
      _
    $region59: #{tpu_custom_call.1} parent=1 // pred_check_branch
      %481 = sbr.rel (0) target = $region61
    $region60: #{tpu_custom_call.1} parent=1 // pred_region
      %s483 = ssub.s32 32, 32
      %484 = vsyncadd [#allocation4], %s483
      %s486 = sshll.u32 [#allocation13], 4
      %s487 = int_to_ptr.vmem [resolvable:$true] %s486
      %489 = dma.vmem_to_hbm [thread:$0]  %s487, 32, %s8, [#allocation4]
    $region61: #{tpu_custom_call.1} parent=1 // pred_fallthru
      _
    // Predicated region
    $region62: #{tpu_custom_call.1} parent=1 // pred_check
      _
    $region63: #{tpu_custom_call.1} parent=1 // pred_check_branch
      %491 = sbr.rel (0) target = $region65
    $region64: #{tpu_custom_call.1} parent=1 // pred_region
      %492 = dma.done [#allocation4], 32
    $region65: #{tpu_custom_call.1} parent=1 // pred_fallthru
      _
    %493 = vsyncpa [#allocation3], 1
    %494 = vsyncpa [#allocation6], 1
    %495 = vsyncpa [#allocation9], 1
    %496 = vsyncpa [#allocation12], 1
    %497 = vsyncpa [#allocation4], 1

</llo_original>
